<compile_context>
chip_gen: v7x
topology: tpu7x:2x2x1
jax: 0.10.0
libtpu: 0.0.40
codegen_flags: <defaults>
</compile_context>

<pallas_src>
import functools
import math

import jax
import jax.numpy as jnp
from jax import lax
from jax.experimental import pallas as pl
from jax.experimental.pallas import tpu as pltpu


def _round_up(x, m):
    return (x + m - 1) // m * m


def _gat_kernel(nt_ref, et_ref, flag_ref,                 # scalar prefetch (SMEM)
                edge_h_ref, a_t_ref, a2_ref, row_ref,     # tiled inputs (VMEM)
                out_ref, acc_ref,                         # output + f32 accumulator
                *, n_tile, out_features, alpha, concat):
    s = pl.program_id(0)
    fl = flag_ref[s]
    is_first = (fl & 1) != 0     # first visit of this node tile -> zero the accumulator
    is_last = (fl & 2) != 0      # last visit of this node tile  -> normalize + store
    is_valid = (fl & 4) != 0     # this step carries a real edge tile (not an empty tile)

    @pl.when(is_first)
    def _init():
        acc_ref[...] = jnp.zeros_like(acc_ref)

    @pl.when(is_valid)
    def _compute():
        edge_h = edge_h_ref[...]                                   # (Et, F_pad) bf16
        # edge_m^T = edge_h @ a^T  (bf16 x bf16 -> f32 acc); padded columns are exactly 0.
        edge_m = jnp.dot(edge_h, a_t_ref[...],
                         preferred_element_type=jnp.float32)       # (Et, OUT_pad) f32
        # z = a_2 . edge_m as a VPU multiply + lane reduction (keeps the MXU free).
        z = jnp.sum(edge_m * a2_ref[...], axis=-1, keepdims=True)  # (Et, 1) f32
        lrelu = jnp.where(z > 0.0, z, alpha * z)
        edge_e = jnp.exp(-lrelu)                                   # (Et, 1) f32

        # Fused payload: cols [0, out) hold edge_e*edge_m, col `out` holds edge_e
        # (the e_rowsum column), remaining padded cols stay 0.  Cast to bf16 for the MXU.
        e_col = (lax.broadcasted_iota(jnp.int32, (1, edge_m.shape[1]), 1)
                 == out_features).astype(jnp.float32)              # (1, OUT_pad)
        edge_we = (edge_e * (edge_m + e_col)).astype(jnp.bfloat16)  # (Et, OUT_pad) bf16

        # Per-tile one-hot scatter mask (bf16, (Nt,1) iota broadcast vs (1,Et) src row).
        row = row_ref[...]                                         # (1, Et) int32
        node_ids = nt_ref[s] * n_tile + lax.broadcasted_iota(
            jnp.int32, (n_tile, 1), 0)                             # (Nt, 1)
        mask = (node_ids == row).astype(jnp.bfloat16)              # (Nt, Et) bf16

        acc_ref[...] += jnp.dot(mask, edge_we,
                                preferred_element_type=jnp.float32)

    @pl.when(is_last)
    def _finalize():
        acc = acc_ref[...]                                         # (Nt, OUT_pad) f32
        e_col = lax.broadcasted_iota(jnp.int32, (1, acc.shape[1]), 1) == out_features
        e_rowsum = jnp.sum(jnp.where(e_col, acc, 0.0), axis=-1, keepdims=True)
        e_rowsum = jnp.where(e_rowsum == 0.0, 1e-12, e_rowsum)
        h = acc * pl.reciprocal(e_rowsum, approx=False)            # multiply, not divide
        if concat:
            # ELU (alpha=1); clamp the exp argument so the unselected branch never overflows.
            h = jnp.where(h > 0.0, h, jnp.exp(jnp.minimum(h, 0.0)) - 1.0)
        out_ref[...] = h


def graph_attention_forward(node_input, edge, edge_embed, edge_list_nhop,
                            edge_embed_nhop, a, a_2, *, alpha, concat=True,
                            n_tile=128, e_tile=1024):
    """Forward pass of GraphAttentionLayer (KBAT).  Fully jittable.

    node_input:       (N, in_features) f32
    edge:             (2, E1) int32
    edge_embed:       (E1, nrela_dim) f32
    edge_list_nhop:   (2, E2) int32
    edge_embed_nhop:  (E2, nrela_dim) f32
    a:                (out_features, 2*in_features + nrela_dim) f32
    a_2:              (1, out_features) f32
    """
    N = node_input.shape[0]
    out_features = a.shape[0]

    # --- glue (plain JAX): concat edges, gather node features, build edge_h in bf16 ---
    edge_all = jnp.concatenate([edge, edge_list_nhop], axis=1)                # (2, E)
    edge_embed_all = jnp.concatenate([edge_embed, edge_embed_nhop], axis=0)   # (E, nrela)
    src = edge_all[0].astype(jnp.int32)
    dst = edge_all[1].astype(jnp.int32)
    ni_bf = node_input.astype(jnp.bfloat16)
    ee_bf = edge_embed_all.astype(jnp.bfloat16)
    # TODO(synk): move this per-edge gather into the kernel (scalar-prefetched indices +
    #             manual DMA) to avoid materializing (E, F) in HBM on v5e.
    edge_h = jnp.concatenate([ni_bf[src], ni_bf[dst], ee_bf], axis=1)         # (E, F) bf16
    E, F = edge_h.shape

    # Sort edges by source node so each N tile touches a contiguous edge range.
    order = jnp.argsort(src)
    src_s = src[order]
    edge_h_s = edge_h[order]

    # --- tiling & lane-dense padding ---
    Nt = min(_round_up(n_tile, 8), _round_up(N, 8))
    Et = min(_round_up(e_tile, 128), _round_up(E, 128))
    N_pad = _round_up(N, Nt)
    E_pad = _round_up(E, Et)
    F_pad = _round_up(F, 128)
    OUT_pad = _round_up(out_features + 1, 128)   # +1 column carries e_rowsum
    n_N = N_pad // Nt
    n_E = E_pad // Et

    edge_h_p = jnp.zeros((E_pad, F_pad), jnp.bfloat16).at[:E, :F].set(edge_h_s)
    # Pad src with N_pad: keeps the array sorted and never matches a real node id.
    row_p = jnp.full((1, E_pad), N_pad, jnp.int32).at[0, :E].set(src_s)
    a_t_p = jnp.zeros((F_pad, OUT_pad), jnp.bfloat16).at[:F, :out_features].set(
        a.T.astype(jnp.bfloat16))
    a2_p = jnp.zeros((1, OUT_pad), jnp.float32).at[:, :out_features].set(
        a_2.astype(jnp.float32))

    # --- per-N-tile contiguous edge-tile ranges ---
    bounds = jnp.arange(n_N + 1, dtype=jnp.int32) * Nt
    pos = jnp.searchsorted(src_s, bounds).astype(jnp.int32)   # (n_N + 1,)
    lo, hi = pos[:-1], pos[1:]
    first_t = (lo // Et).astype(jnp.int32)
    cnt = jnp.where(hi > lo, (hi + Et - 1) // Et - first_t, 0).astype(jnp.int32)

    # --- flattened static-length visit schedule (no host sync, no dead-step DMA) ---
    # Each node tile contributes max(cnt_i, 1) steps; the total is provably <= n_E+n_N-1,
    # so S = n_E + n_N is a static bound.  Padding steps repeat the last real (nt, et)
    # block indices with all flags 0 (no DMA change, no compute, no writes).
    S = n_E + n_N
    v = jnp.maximum(cnt, 1)
    starts = jnp.concatenate(
        [jnp.zeros((1,), jnp.int32), jnp.cumsum(v).astype(jnp.int32)])        # (n_N+1,)
    total = starts[-1]
    s_idx = jnp.arange(S, dtype=jnp.int32)
    nt = jnp.clip(jnp.searchsorted(starts, s_idx, side="right").astype(jnp.int32) - 1,
                  0, n_N - 1)
    j = s_idx - starts[nt]
    live = s_idx < total
    is_first = (j == 0) & live
    is_last = (j == v[nt] - 1) & live
    is_valid = (j < cnt[nt]) & live
    sched_nt = nt.astype(jnp.int32)
    sched_et = jnp.clip(first_t[nt] + jnp.minimum(j, v[nt] - 1),
                        0, n_E - 1).astype(jnp.int32)
    sched_flags = (is_first.astype(jnp.int32)
                   + 2 * is_last.astype(jnp.int32)
                   + 4 * is_valid.astype(jnp.int32))

    kernel = functools.partial(
        _gat_kernel, n_tile=Nt, out_features=out_features,
        alpha=float(alpha), concat=bool(concat))

    grid_spec = pltpu.PrefetchScalarGridSpec(
        num_scalar_prefetch=3,
        grid=(S,),
        in_specs=[
            pl.BlockSpec((Et, F_pad), lambda s, nt, et, fl: (et[s], 0)),
            pl.BlockSpec((F_pad, OUT_pad), lambda s, nt, et, fl: (0, 0)),
            pl.BlockSpec((1, OUT_pad), lambda s, nt, et, fl: (0, 0)),
            pl.BlockSpec((1, Et), lambda s, nt, et, fl: (0, et[s])),
        ],
        out_specs=pl.BlockSpec((Nt, OUT_pad), lambda s, nt, et, fl: (nt[s], 0)),
        scratch_shapes=[pltpu.VMEM((Nt, OUT_pad), jnp.float32)],
    )

    out_p = pl.pallas_call(
        kernel,
        out_shape=jax.ShapeDtypeStruct((N_pad, OUT_pad), jnp.float32),
        grid_spec=grid_spec,
        compiler_params=pltpu.CompilerParams(
            dimension_semantics=("arbitrary",)),
    )(sched_nt, sched_et, sched_flags, edge_h_p, a_t_p, a2_p, row_p)

    return out_p[:N, :out_features]


def _reference_forward(node_input, edge, edge_embed, edge_list_nhop,
                       edge_embed_nhop, a, a_2, *, alpha, concat=True):
    """Pure-JAX f32 reference matching the PyTorch module."""
    N = node_input.shape[0]
    out_features = a.shape[0]
    edge_all = jnp.concatenate([edge, edge_list_nhop], axis=1)
    edge_embed_all = jnp.concatenate([edge_embed, edge_embed_nhop], axis=0)
    src = edge_all[0]
    dst = edge_all[1]
    edge_h = jnp.concatenate([node_input[src], node_input[dst], edge_embed_all], axis=1)
    edge_m = edge_h @ a.T                                # (E, out)
    z = edge_m @ a_2.T                                   # (E, 1)
    powers = -jnp.where(z > 0, z, alpha * z)
    edge_e = jnp.exp(powers)                             # (E, 1)
    e_rowsum = jnp.zeros((N, 1), jnp.float32).at[src].add(edge_e)
    e_rowsum = jnp.where(e_rowsum == 0.0, 1e-12, e_rowsum)
    edge_w = edge_e * edge_m                             # (E, out)
    h_prime = jnp.zeros((N, out_features), jnp.float32).at[src].add(edge_w)
    h_prime = h_prime / e_rowsum
    if concat:
        h_prime = jnp.where(h_prime > 0.0, h_prime, jnp.exp(h_prime) - 1.0)
    return h_prime


def _xavier_normal(key, shape, gain):
    fan_out, fan_in = shape
    std = gain * math.sqrt(2.0 / (fan_in + fan_out))
    return std * jax.random.normal(key, shape, dtype=jnp.float32)


if __name__ == "__main__":
    # Small shapes consistent with the module.
    num_nodes = 64
    in_features = 32
    out_features = 32
    nrela_dim = 16
    alpha = 0.2
    concat = True
    E1, E2 = 192, 64   # direct edges, n-hop edges

    key = jax.random.PRNGKey(0)
    k_inp, k_e1, k_e2, k_r1, k_r2, k_a, k_a2 = jax.random.split(key, 7)

    node_input = jax.random.normal(k_inp, (num_nodes, in_features), dtype=jnp.float32)
    edge = jax.random.randint(k_e1, (2, E1), 0, num_nodes, dtype=jnp.int32)
    edge_list_nhop = jax.random.randint(k_e2, (2, E2), 0, num_nodes, dtype=jnp.int32)
    edge_embed = jax.random.normal(k_r1, (E1, nrela_dim), dtype=jnp.float32)
    edge_embed_nhop = jax.random.normal(k_r2, (E2, nrela_dim), dtype=jnp.float32)

    # Deterministic parameter init (xavier_normal_, gain=1.414), like __init__.
    a = _xavier_normal(k_a, (out_features, 2 * in_features + nrela_dim), 1.414)
    a_2 = _xavier_normal(k_a2, (1, out_features), 1.414)

    # Small tiles so the multi-tile schedule / tile-boundary-overlap paths are exercised.
    # The wrapper is now jittable (flattened static-length schedule, no host sync).
    fwd = jax.jit(functools.partial(graph_attention_forward,
                                    alpha=alpha, concat=concat,
                                    n_tile=32, e_tile=128))
    out = fwd(node_input, edge, edge_embed, edge_list_nhop, edge_embed_nhop, a, a_2)
    out = jax.block_until_ready(out)

    ref = _reference_forward(node_input, edge, edge_embed, edge_list_nhop,
                             edge_embed_nhop, a, a_2,
                             alpha=alpha, concat=concat)
    ref = jax.block_until_ready(ref)

    assert out.shape == ref.shape
    assert not bool(jnp.isnan(out).any()), "NaN in kernel output"
    # bf16 MXU operands (per perf review) -> compare against the f32 reference at a
    # bf16-appropriate tolerance; the scatter/normalization logic itself is exact.
    assert jnp.allclose(out, ref, rtol=5e-2, atol=5e-2), "Mismatch vs. reference"

    print("KERNEL_OK")
</pallas_src>

<mosaic_0001>
module attributes {stable_mosaic.version = 11 : i64} {
  func.func @_gat_kernel(%arg0: i32, %arg1: memref<4xi32, #tpu.memory_space<smem>>, %arg2: memref<4xi32, #tpu.memory_space<smem>>, %arg3: memref<4xi32, #tpu.memory_space<smem>>, %arg4: memref<128x128xbf16, #tpu.memory_space<vmem>>, %arg5: memref<128x128xbf16, #tpu.memory_space<vmem>>, %arg6: memref<1x128xf32, #tpu.memory_space<vmem>>, %arg7: memref<1x128xi32, #tpu.memory_space<vmem>>, %arg8: memref<32x128xf32, #tpu.memory_space<vmem>>, %arg9: memref<32x128xf32, #tpu.memory_space<vmem>>) attributes {dimension_semantics = [#tpu.dimension_semantics<arbitrary>], iteration_bounds = array<i64: 4>, scalar_prefetch = 3 : i64, scratch_operands = 1 : i64, tpu.core_type = #tpu.core_type<tc>, window_params = [{transform_indices = @transform_0, window_bounds = array<i64: 128, 128>}, {pipeline_mode = #tpu.pipeline_mode<synchronous>, transform_indices = @transform_1, window_bounds = array<i64: 128, 128>}, {pipeline_mode = #tpu.pipeline_mode<synchronous>, transform_indices = @transform_2, window_bounds = array<i64: 1, 128>}, {transform_indices = @transform_3, window_bounds = array<i64: 1, 128>}, {transform_indices = @transform_4, window_bounds = array<i64: 32, 128>}]} {
    %0 = arith.index_cast %arg0 : i32 to index
    %1 = memref.load %arg3[%0] : memref<4xi32, #tpu.memory_space<smem>>
    %c1_i32 = arith.constant 1 : i32
    %2 = arith.andi %1, %c1_i32 : i32
    %c0_i32 = arith.constant 0 : i32
    %3 = arith.cmpi ne, %2, %c0_i32 : i32
    %c2_i32 = arith.constant 2 : i32
    %4 = arith.andi %1, %c2_i32 : i32
    %c0_i32_0 = arith.constant 0 : i32
    %5 = arith.cmpi ne, %4, %c0_i32_0 : i32
    %c4_i32 = arith.constant 4 : i32
    %6 = arith.andi %1, %c4_i32 : i32
    %c0_i32_1 = arith.constant 0 : i32
    %7 = arith.cmpi ne, %6, %c0_i32_1 : i32
    %8 = arith.extui %3 : i1 to i32
    %c0_i32_2 = arith.constant 0 : i32
    %9 = arith.cmpi ne, %8, %c0_i32_2 : i32
    scf.if %9 {
      %cst = arith.constant 0.000000e+00 : f32
      %14 = vector.broadcast %cst : f32 to vector<32x128xf32>
      %c0 = arith.constant 0 : index
      %c0_5 = arith.constant 0 : index
      %15 = vector.load %arg9[%c0, %c0_5] : memref<32x128xf32, #tpu.memory_space<vmem>>, vector<32x128xf32>
      tpu.vector_store %arg9[%c0, %c0_5], %14 {strides = array<i32>} : memref<32x128xf32, #tpu.memory_space<vmem>>, vector<32x128xf32>,
    } else {
    }
    %10 = arith.extui %7 : i1 to i32
    %c0_i32_3 = arith.constant 0 : i32
    %11 = arith.cmpi ne, %10, %c0_i32_3 : i32
    scf.if %11 {
      %c0 = arith.constant 0 : index
      %c0_5 = arith.constant 0 : index
      %14 = vector.load %arg4[%c0, %c0_5] : memref<128x128xbf16, #tpu.memory_space<vmem>>, vector<128x128xbf16>
      %c0_6 = arith.constant 0 : index
      %c0_7 = arith.constant 0 : index
      %15 = vector.load %arg5[%c0_6, %c0_7] : memref<128x128xbf16, #tpu.memory_space<vmem>>, vector<128x128xbf16>
      %cst = arith.constant dense<0.000000e+00> : vector<128x128xf32>
      %16 = tpu.matmul %14, %15, %cst {dimension_numbers = #tpu.dot_dimension_numbers<[1], [0], [0], [1], [0, 0, 1, 1], [], []>} : vector<128x128xbf16>, vector<128x128xbf16>, vector<128x128xf32> -> vector<128x128xf32>
      %c0_8 = arith.constant 0 : index
      %c0_9 = arith.constant 0 : index
      %17 = vector.load %arg6[%c0_8, %c0_9] : memref<1x128xf32, #tpu.memory_space<vmem>>, vector<1x128xf32>
      %18 = vector.broadcast %17 : vector<1x128xf32> to vector<128x128xf32>
      %19 = arith.mulf %16, %18 : vector<128x128xf32>
      %cst_10 = arith.constant dense<0.000000e+00> : vector<128xf32>
      %20 = vector.multi_reduction <add>, %19, %cst_10 [1] : vector<128x128xf32> to vector<128xf32>
      %21 = vector.shape_cast %20 : vector<128xf32> to vector<128x1xf32>
      %cst_11 = arith.constant 0.000000e+00 : f32
      %22 = vector.broadcast %cst_11 : f32 to vector<128x1xf32>
      %23 = arith.cmpf ogt, %21, %22 : vector<128x1xf32>
      %cst_12 = arith.constant 2.000000e-01 : f32
      %24 = vector.broadcast %cst_12 : f32 to vector<128x1xf32>
      %25 = arith.mulf %24, %21 : vector<128x1xf32>
      %26 = arith.select %23, %21, %25 : vector<128x1xi1>, vector<128x1xf32>
      %cst_13 = arith.constant 0.000000e+00 : f32
      %27 = vector.broadcast %cst_13 : f32 to vector<128x1xf32>
      %28 = arith.subf %27, %26 : vector<128x1xf32>
      %29 = math.exp %28 : vector<128x1xf32>
      %30 = tpu.iota {dimensions = array<i32: 1>} : vector<1x128xi32>
      %c32_i32 = arith.constant 32 : i32
      %31 = vector.broadcast %c32_i32 : i32 to vector<1x128xi32>
      %32 = arith.cmpi eq, %30, %31 : vector<1x128xi32>
      %33 = arith.extui %32 : vector<1x128xi1> to vector<1x128xi32>
      %34 = arith.sitofp %33 : vector<1x128xi32> to vector<1x128xf32>
      %35 = vector.broadcast %34 : vector<1x128xf32> to vector<128x128xf32>
      %36 = arith.addf %16, %35 : vector<128x128xf32>
      %37 = vector.broadcast %29 : vector<128x1xf32> to vector<128x128xf32>
      %38 = arith.mulf %37, %36 : vector<128x128xf32>
      %39 = arith.truncf %38 : vector<128x128xf32> to vector<128x128xbf16>
      %c0_14 = arith.constant 0 : index
      %c0_15 = arith.constant 0 : index
      %40 = vector.load %arg7[%c0_14, %c0_15] : memref<1x128xi32, #tpu.memory_space<vmem>>, vector<1x128xi32>
      %41 = arith.index_cast %arg0 : i32 to index
      %42 = memref.load %arg1[%41] : memref<4xi32, #tpu.memory_space<smem>>
      %c32_i32_16 = arith.constant 32 : i32
      %43 = arith.muli %42, %c32_i32_16 : i32
      %44 = tpu.iota {dimensions = array<i32: 0>} : vector<32x1xi32>
      %45 = vector.broadcast %43 : i32 to vector<32x1xi32>
      %46 = arith.addi %45, %44 : vector<32x1xi32>
      %47 = vector.broadcast %46 : vector<32x1xi32> to vector<32x128xi32>
      %48 = vector.broadcast %40 : vector<1x128xi32> to vector<32x128xi32>
      %49 = arith.cmpi eq, %47, %48 : vector<32x128xi32>
      %50 = arith.extui %49 : vector<32x128xi1> to vector<32x128xi32>
      %51 = arith.sitofp %50 : vector<32x128xi32> to vector<32x128xf32>
      %52 = arith.truncf %51 : vector<32x128xf32> to vector<32x128xbf16>
      %c0_17 = arith.constant 0 : index
      %c0_18 = arith.constant 0 : index
      %53 = vector.load %arg9[%c0_17, %c0_18] : memref<32x128xf32, #tpu.memory_space<vmem>>, vector<32x128xf32>
      %cst_19 = arith.constant dense<0.000000e+00> : vector<32x128xf32>
      %54 = tpu.matmul %52, %39, %cst_19 {dimension_numbers = #tpu.dot_dimension_numbers<[1], [0], [0], [1], [0, 0, 1, 1], [], []>} : vector<32x128xbf16>, vector<128x128xbf16>, vector<32x128xf32> -> vector<32x128xf32>
      %55 = arith.addf %53, %54 : vector<32x128xf32>
      %c0_20 = arith.constant 0 : index
      %c0_21 = arith.constant 0 : index
      %56 = vector.load %arg9[%c0_20, %c0_21] : memref<32x128xf32, #tpu.memory_space<vmem>>, vector<32x128xf32>
      tpu.vector_store %arg9[%c0_20, %c0_21], %55 {strides = array<i32>} : memref<32x128xf32, #tpu.memory_space<vmem>>, vector<32x128xf32>,
    } else {
    }
    %12 = arith.extui %5 : i1 to i32
    %c0_i32_4 = arith.constant 0 : i32
    %13 = arith.cmpi ne, %12, %c0_i32_4 : i32
    scf.if %13 {
      %c0 = arith.constant 0 : index
      %c0_5 = arith.constant 0 : index
      %14 = vector.load %arg9[%c0, %c0_5] : memref<32x128xf32, #tpu.memory_space<vmem>>, vector<32x128xf32>
      %15 = tpu.iota {dimensions = array<i32: 1>} : vector<1x128xi32>
      %c32_i32 = arith.constant 32 : i32
      %16 = vector.broadcast %c32_i32 : i32 to vector<1x128xi32>
      %17 = arith.cmpi eq, %15, %16 : vector<1x128xi32>
      %cst = arith.constant 0.000000e+00 : f32
      %18 = vector.shape_cast %17 : vector<1x128xi1> to vector<1x128xi1>
      %19 = vector.broadcast %18 : vector<1x128xi1> to vector<32x128xi1>
      %20 = vector.broadcast %cst : f32 to vector<32x128xf32>
      %21 = arith.select %19, %14, %20 : vector<32x128xi1>, vector<32x128xf32>
      %cst_6 = arith.constant dense<0.000000e+00> : vector<32xf32>
      %22 = vector.multi_reduction <add>, %21, %cst_6 [1] : vector<32x128xf32> to vector<32xf32>
      %23 = vector.shape_cast %22 : vector<32xf32> to vector<32x1xf32>
      %cst_7 = arith.constant 0.000000e+00 : f32
      %24 = vector.broadcast %cst_7 : f32 to vector<32x1xf32>
      %25 = arith.cmpf oeq, %23, %24 : vector<32x1xf32>
      %cst_8 = arith.constant 9.99999996E-13 : f32
      %26 = vector.broadcast %cst_8 : f32 to vector<32x1xf32>
      %27 = arith.select %25, %26, %23 : vector<32x1xi1>, vector<32x1xf32>
      %28 = tpu.reciprocal %27 : vector<32x1xf32> -> vector<32x1xf32>
      %29 = vector.broadcast %28 : vector<32x1xf32> to vector<32x128xf32>
      %30 = arith.mulf %14, %29 : vector<32x128xf32>
      %cst_9 = arith.constant 0.000000e+00 : f32
      %31 = vector.broadcast %cst_9 : f32 to vector<32x128xf32>
      %32 = arith.cmpf ogt, %30, %31 : vector<32x128xf32>
      %cst_10 = arith.constant 0.000000e+00 : f32
      %33 = vector.broadcast %cst_10 : f32 to vector<32x128xf32>
      %34 = arith.minimumf %30, %33 : vector<32x128xf32>
      %35 = math.exp %34 : vector<32x128xf32>
      %cst_11 = arith.constant 1.000000e+00 : f32
      %36 = vector.broadcast %cst_11 : f32 to vector<32x128xf32>
      %37 = arith.subf %35, %36 : vector<32x128xf32>
      %38 = arith.select %32, %30, %37 : vector<32x128xi1>, vector<32x128xf32>
      %c0_12 = arith.constant 0 : index
      %c0_13 = arith.constant 0 : index
      %39 = vector.load %arg8[%c0_12, %c0_13] : memref<32x128xf32, #tpu.memory_space<vmem>>, vector<32x128xf32>
      tpu.vector_store %arg8[%c0_12, %c0_13], %38 {strides = array<i32>} : memref<32x128xf32, #tpu.memory_space<vmem>>, vector<32x128xf32>,
    } else {
    }
    return
  }
  func.func @transform_0(%arg0: i32, %arg1: memref<4xi32, #tpu.memory_space<smem>>, %arg2: memref<4xi32, #tpu.memory_space<smem>>, %arg3: memref<4xi32, #tpu.memory_space<smem>>) -> (i32, i32) {
    %0 = arith.index_cast %arg0 : i32 to index
    %1 = memref.load %arg2[%0] : memref<4xi32, #tpu.memory_space<smem>>
    %c0_i32 = arith.constant 0 : i32
    %c0_i32_0 = arith.constant 0 : i32
    return %1, %c0_i32 : i32, i32
  }
  func.func @transform_1(%arg0: i32, %arg1: memref<4xi32, #tpu.memory_space<smem>>, %arg2: memref<4xi32, #tpu.memory_space<smem>>, %arg3: memref<4xi32, #tpu.memory_space<smem>>) -> (i32, i32) {
    %c0_i32 = arith.constant 0 : i32
    %c0_i32_0 = arith.constant 0 : i32
    %c0_i32_1 = arith.constant 0 : i32
    return %c0_i32, %c0_i32_0 : i32, i32
  }
  func.func @transform_2(%arg0: i32, %arg1: memref<4xi32, #tpu.memory_space<smem>>, %arg2: memref<4xi32, #tpu.memory_space<smem>>, %arg3: memref<4xi32, #tpu.memory_space<smem>>) -> (i32, i32) {
    %c0_i32 = arith.constant 0 : i32
    %c0_i32_0 = arith.constant 0 : i32
    %c0_i32_1 = arith.constant 0 : i32
    return %c0_i32, %c0_i32_0 : i32, i32
  }
  func.func @transform_3(%arg0: i32, %arg1: memref<4xi32, #tpu.memory_space<smem>>, %arg2: memref<4xi32, #tpu.memory_space<smem>>, %arg3: memref<4xi32, #tpu.memory_space<smem>>) -> (i32, i32) {
    %0 = arith.index_cast %arg0 : i32 to index
    %1 = memref.load %arg2[%0] : memref<4xi32, #tpu.memory_space<smem>>
    %c0_i32 = arith.constant 0 : i32
    %c0_i32_0 = arith.constant 0 : i32
    return %c0_i32, %1 : i32, i32
  }
  func.func @transform_4(%arg0: i32, %arg1: memref<4xi32, #tpu.memory_space<smem>>, %arg2: memref<4xi32, #tpu.memory_space<smem>>, %arg3: memref<4xi32, #tpu.memory_space<smem>>) -> (i32, i32) {
    %0 = arith.index_cast %arg0 : i32 to index
    %1 = memref.load %arg1[%0] : memref<4xi32, #tpu.memory_space<smem>>
    %c0_i32 = arith.constant 0 : i32
    %c0_i32_0 = arith.constant 0 : i32
    return %1, %c0_i32 : i32, i32
  }
}

</mosaic_0001>

<llo_original>
// kernel: custom-call
$region0: #{custom-call}
  %s0 = inlined_call_operand.vmem [shape: u32[3], index: 0, kind: output, shape index: {}]

// kernel: custom-call.2
$region0: #{custom-call.2}
  %s0 = inlined_call_operand.vmem [shape: u32[4], index: 0, kind: output, shape index: {}]

// kernel: graph_attention_forward.1
$region0: #{graph_attention_forward.1}
  #allocation0 [shape = 'u32[]', space=smem, size = 0x4, offset = 0x4, fixed_abs, tag = 'smem constant byte address 0x4 - core index']
  #allocation1 [shape = 'u32[144,128]{1,0:T(1,128)}', space=vmem, size = 0x12000, scoped, tag = 'internal scratch']
  #allocation2 [shape = 'f32[32,128]{1,0:T(8,128)}', space=vmem, size = 0x4000, scoped, tag = 'scratch operand']
  #allocation3 [shape = 's32[1]{0}', space=sflag, size = 0x4, scoped, tag = 'scoped memory for graph_attention_forward.1']
  #allocation4 [shape = 'u8[512]{0}', space=smem, size = 0x200, scoped, tag = 'prefetched SMEM operand 0']
  #allocation5 [shape = 'u8[512]{0}', space=smem, size = 0x200, scoped, tag = 'prefetched SMEM operand 1']
  #allocation6 [shape = 'u8[512]{0}', space=smem, size = 0x200, scoped, tag = 'prefetched SMEM operand 2']
  %s0 = inlined_call_operand.vmem [shape: s32[4], index: 0, kind: input, shape index: {}]
  %s1 = inlined_call_operand.vmem [shape: s32[4], index: 1, kind: input, shape index: {}]
  %s2 = inlined_call_operand.vmem [shape: s32[4], index: 2, kind: input, shape index: {}]
  %s3 = inlined_call_operand.vmem [shape: bf16[256,128], index: 3, kind: input, shape index: {}]
  %s4 = inlined_call_operand.vmem [shape: bf16[128,128], index: 4, kind: input, shape index: {}]
  %s5 = inlined_call_operand.vmem [shape: f32[1,128], index: 5, kind: input, shape index: {}]
  %s6 = inlined_call_operand.vmem [shape: s32[1,256], index: 6, kind: input, shape index: {}]
  %s7 = inlined_call_operand.vmem [shape: f32[64,128], index: 7, kind: output, shape index: {}]
  %s8 = sld [smem:[#allocation0]]
  $region61: #{graph_attention_forward.1} parent=0
    _
  %s10 = ssub.s32 1, %s8
  %s11 = scalar_select 0, %s10, %s8
  %s12 = sshll.u32 %s0, 4
  %s13 = int_to_ptr.vmem [resolvable:$true] %s12
  %15 = dma.vmem_to_smem %s13, 16, [#allocation4], [#allocation3]
  %s16 = sshll.u32 %s1, 4
  %s17 = int_to_ptr.vmem [resolvable:$true] %s16
  %19 = dma.vmem_to_smem %s17, 16, [#allocation5], [#allocation3]
  %s20 = sshll.u32 %s2, 4
  %s21 = int_to_ptr.vmem [resolvable:$true] %s20
  %23 = dma.vmem_to_smem %s21, 16, [#allocation6], [#allocation3]
  %24 = dma.done [#allocation3], 48
  %25 = sfence
  loop: start=0, step=1, limit=6
  $region2: #{graph_attention_forward.1} parent=0 // loop_pre_header
    _
  $region3: #{graph_attention_forward.1} parent=0 // loop_header
    %s27 = sphi 0, %s31
    %p28 = scmp.ge.s32.totalorder %s27, 6
    %s39 = sphi 0, %s41
    %s42 = sphi 0, %s39
    %s43 = sphi 0, %s42
    %s59 = sphi 0, %s43
    %s63 = sphi 0, %s63
    %s65 = sphi 0, %s63
    %s66 = sphi 0, %s65
    %s80 = sphi 0, %s66
    %s84 = sphi 0, %s84
    %s86 = sphi 0, %s84
    %s87 = sphi 0, %s86
    %s101 = sphi 0, %s87
    %s109 = sphi 0, %s111
    %s112 = sphi 0, %s109
    %s113 = sphi 0, %s112
    %s129 = sphi 0, %s113
    %s137 = sphi 0, %s139
    %s140 = sphi 0, %s137
    %s141 = sphi 0, %s140
    %s157 = sphi 0, %s141
  $region4: #{graph_attention_forward.1} parent=0 // loop_header_branch
    %30 = sbr.rel (%p28) target = $region8
  $region5: #{graph_attention_forward.1} parent=0 // loop_body
    %s32 = ssub.s32 %s27, 1
    %s33 = ssub.s32 %s27, 2
    %s34 = sadd.s32 %s27, 1
    %s35 = sld [smem:[#allocation5 + %s27]]
    %s36 = sld [smem:[#allocation5 + %s34]]
    %s37 = ssub.s32 %s35, %s36
    %p38 = scmp.eq.s32.totalorder %s37, 0
    %s40 = sadd.s32 %s39, 1
    %s41 = scalar_select %p38, %s39, %s40
    %p44 = pneg %p38
    %p45 = scmp.eq.s32.totalorder %s27, 3
    %p46 = por %p44, %p45
    %p47 = scmp.ne.s32.totalorder %s39, %s42
    %p48 = scmp.eq.s32.totalorder %s27, 0
    %p49 = por %p47, %p48
    %p50 = scmp.ne.s32.totalorder %s39, %s42
    %p51 = scmp.eq.s32.totalorder %s32, 3
    %p52 = por %p50, %p51
    %p53 = scmp.ne.s32.totalorder %s42, %s43
    %p54 = scmp.eq.s32.totalorder %s32, 0
    %p55 = por %p53, %p54
    %p56 = scmp.ne.s32.totalorder %s42, %s43
    %p57 = scmp.eq.s32.totalorder %s33, 3
    %p58 = por %p56, %p57
    %p60 = scmp.ne.s32.totalorder %s43, %s59
    %p61 = scmp.eq.s32.totalorder %s33, 0
    %p62 = por %p60, %p61
    %s64 = sadd.s32 %s63, 1
    %p67 = scmp.eq.s32.totalorder %s27, 3
    %p68 = scmp.ne.s32.totalorder %s63, %s65
    %p69 = scmp.eq.s32.totalorder %s27, 0
    %p70 = por %p68, %p69
    %p71 = scmp.ne.s32.totalorder %s63, %s65
    %p72 = scmp.eq.s32.totalorder %s32, 3
    %p73 = por %p71, %p72
    %p74 = scmp.ne.s32.totalorder %s65, %s66
    %p75 = scmp.eq.s32.totalorder %s32, 0
    %p76 = por %p74, %p75
    %p77 = scmp.ne.s32.totalorder %s65, %s66
    %p78 = scmp.eq.s32.totalorder %s33, 3
    %p79 = por %p77, %p78
    %p81 = scmp.ne.s32.totalorder %s66, %s80
    %p82 = scmp.eq.s32.totalorder %s33, 0
    %p83 = por %p81, %p82
    %s85 = sadd.s32 %s84, 1
    %p88 = scmp.eq.s32.totalorder %s27, 3
    %p89 = scmp.ne.s32.totalorder %s84, %s86
    %p90 = scmp.eq.s32.totalorder %s27, 0
    %p91 = por %p89, %p90
    %p92 = scmp.ne.s32.totalorder %s84, %s86
    %p93 = scmp.eq.s32.totalorder %s32, 3
    %p94 = por %p92, %p93
    %p95 = scmp.ne.s32.totalorder %s86, %s87
    %p96 = scmp.eq.s32.totalorder %s32, 0
    %p97 = por %p95, %p96
    %p98 = scmp.ne.s32.totalorder %s86, %s87
    %p99 = scmp.eq.s32.totalorder %s33, 3
    %p100 = por %p98, %p99
    %p102 = scmp.ne.s32.totalorder %s87, %s101
    %p103 = scmp.eq.s32.totalorder %s33, 0
    %p104 = por %p102, %p103
    %s105 = sld [smem:[#allocation5 + %s27]]
    %s106 = sld [smem:[#allocation5 + %s34]]
    %s107 = ssub.s32 %s105, %s106
    %p108 = scmp.eq.s32.totalorder %s107, 0
    %s110 = sadd.s32 %s109, 1
    %s111 = scalar_select %p108, %s109, %s110
    %p114 = pneg %p108
    %p115 = scmp.eq.s32.totalorder %s27, 3
    %p116 = por %p114, %p115
    %p117 = scmp.ne.s32.totalorder %s109, %s112
    %p118 = scmp.eq.s32.totalorder %s27, 0
    %p119 = por %p117, %p118
    %p120 = scmp.ne.s32.totalorder %s109, %s112
    %p121 = scmp.eq.s32.totalorder %s32, 3
    %p122 = por %p120, %p121
    %p123 = scmp.ne.s32.totalorder %s112, %s113
    %p124 = scmp.eq.s32.totalorder %s32, 0
    %p125 = por %p123, %p124
    %p126 = scmp.ne.s32.totalorder %s112, %s113
    %p127 = scmp.eq.s32.totalorder %s33, 3
    %p128 = por %p126, %p127
    %p130 = scmp.ne.s32.totalorder %s113, %s129
    %p131 = scmp.eq.s32.totalorder %s33, 0
    %p132 = por %p130, %p131
    %s133 = sld [smem:[#allocation4 + %s27]]
    %s134 = sld [smem:[#allocation4 + %s34]]
    %s135 = ssub.s32 %s133, %s134
    %p136 = scmp.eq.s32.totalorder %s135, 0
    %s138 = sadd.s32 %s137, 1
    %s139 = scalar_select %p136, %s137, %s138
    %p142 = pneg %p136
    %p143 = scmp.eq.s32.totalorder %s27, 3
    %p144 = por %p142, %p143
    %p145 = scmp.ne.s32.totalorder %s137, %s140
    %p146 = scmp.eq.s32.totalorder %s27, 0
    %p147 = por %p145, %p146
    %p148 = scmp.ne.s32.totalorder %s137, %s140
    %p149 = scmp.eq.s32.totalorder %s32, 3
    %p150 = por %p148, %p149
    %p151 = scmp.ne.s32.totalorder %s140, %s141
    %p152 = scmp.eq.s32.totalorder %s32, 0
    %p153 = por %p151, %p152
    %p154 = scmp.ne.s32.totalorder %s140, %s141
    %p155 = scmp.eq.s32.totalorder %s33, 3
    %p156 = por %p154, %p155
    %p158 = scmp.ne.s32.totalorder %s141, %s157
    %p159 = scmp.eq.s32.totalorder %s33, 0
    %p160 = por %p158, %p159
    %p161 = scmp.le.s32.totalorder 1, %s27
    %p162 = scmp.lt.s32.totalorder %s27, 5
    %p163 = pnand %p161, %p162
    %p164 = pneg %p163
    // Predicated region
    $region9: #{graph_attention_forward.1} parent=5 // pred_check
      _
    $region10: #{graph_attention_forward.1} parent=5 // pred_check_branch
      %166 = sbr.rel (%p163) target = $region12
    $region11: #{graph_attention_forward.1} parent=5 // pred_region
      %s167 = ssub.s32 %s27, 1
      // Predicated region
      $region13: #{graph_attention_forward.1} parent=11 // pred_check
        %p168 = pneg %p76
      $region14: #{graph_attention_forward.1} parent=11 // pred_check_branch
        %170 = sbr.rel (%p168) target = $region16
      $region15: #{graph_attention_forward.1} parent=11 // pred_region
        _
      $region16: #{graph_attention_forward.1} parent=11 // pred_fallthru
        _
      // Predicated region
      $region17: #{graph_attention_forward.1} parent=11 // pred_check
        %p171 = pneg %p97
      $region18: #{graph_attention_forward.1} parent=11 // pred_check_branch
        %173 = sbr.rel (%p171) target = $region20
      $region19: #{graph_attention_forward.1} parent=11 // pred_region
        _
      $region20: #{graph_attention_forward.1} parent=11 // pred_fallthru
        _
    $region12: #{graph_attention_forward.1} parent=5 // pred_fallthru
      _
    %p174 = scmp.lt.s32.totalorder %s27, 4
    // Predicated region
    $region21: #{graph_attention_forward.1} parent=5 // pred_check
      %p175 = pneg %p174
    $region22: #{graph_attention_forward.1} parent=5 // pred_check_branch
      %177 = sbr.rel (%p175) target = $region24
    $region23: #{graph_attention_forward.1} parent=5 // pred_region
      // Predicated region
      $region25: #{graph_attention_forward.1} parent=23 // pred_check
        %p178 = pneg %p49
      $region26: #{graph_attention_forward.1} parent=23 // pred_check_branch
        %180 = sbr.rel (%p178) target = $region28
      $region27: #{graph_attention_forward.1} parent=23 // pred_region
        %s181 = sld [smem:[#allocation5 + %s27]]
        %s182 = smul.u32 16, %s181
        %p183 = scmp.lt.s32.totalorder %s182, 31
        %s184 = scalar_select %p183, %s182, 31
        %s185 = smul.addr %s184, 4
        %s186 = scalar_lea.vmem %s3, %s185
        %s187 = sld [smem:[#allocation5 + %s27]]
        %s188 = smul.u32 16, %s187
      $region28: #{graph_attention_forward.1} parent=23 // pred_fallthru
        _
      // Predicated region
      $region29: #{graph_attention_forward.1} parent=23 // pred_check
        %p189 = pneg %p119
      $region30: #{graph_attention_forward.1} parent=23 // pred_check_branch
        %191 = sbr.rel (%p189) target = $region32
      $region31: #{graph_attention_forward.1} parent=23 // pred_region
        %s192 = sld [smem:[#allocation5 + %s27]]
        %p193 = scmp.lt.s32.totalorder %s192, 1
        %s194 = scalar_select %p193, %s192, 1
        %s195 = scalar_lea.vmem %s6, %s194
        %s196 = sld [smem:[#allocation5 + %s27]]
      $region32: #{graph_attention_forward.1} parent=23 // pred_fallthru
        _
    $region24: #{graph_attention_forward.1} parent=5 // pred_fallthru
      _
    %p197 = scmp.le.s32.totalorder 1, %s27
    %p198 = scmp.lt.s32.totalorder %s27, 5
    %p199 = pnand %p197, %p198
    %p200 = pneg %p199
    // Predicated region
    $region33: #{graph_attention_forward.1} parent=5 // pred_check
      _
    $region34: #{graph_attention_forward.1} parent=5 // pred_check_branch
      %202 = sbr.rel (%p199) target = $region36
    $region35: #{graph_attention_forward.1} parent=5 // pred_region
      %s203 = ssub.s32 %s27, 1
      %s204 = sld [smem:[#allocation5 + %s32]]
      %s205 = smul.u32 16, %s204
      %p206 = scmp.lt.s32.totalorder %s205, 31
      %s207 = scalar_select %p206, %s205, 31
      %s208 = smul.addr %s207, 4
      %s209 = scalar_lea.vmem %s3, %s208
      %p210 = pneg %p55
      %p211 = pneg %p52
      %p212 = pneg %p76
      %p213 = pneg %p73
      %p214 = pneg %p97
      %p215 = pneg %p94
      %s216 = sld [smem:[#allocation5 + %s32]]
      %p217 = scmp.lt.s32.totalorder %s216, 1
      %s218 = scalar_select %p217, %s216, 1
      %s219 = scalar_lea.vmem %s6, %s218
      %p220 = pneg %p125
      %p221 = pneg %p122
      %p222 = pneg %p153
      %p223 = pneg %p150
      %s224 = sld [smem:[#allocation4 + %s32]]
      %s225 = smul.u32 4, %s224
      %p226 = scmp.lt.s32.totalorder %s225, 7
      %s227 = scalar_select %p226, %s225, 7
      %s228 = smul.addr %s227, 8
      %s229 = scalar_lea.vmem %s7, %s228
      %s230 = sld [smem:[#allocation5 + %s32]]
      %s231 = smul.u32 16, %s230
      %p232 = scmp.lt.s32.totalorder %s231, 31
      %s233 = scalar_select %p232, %s231, 31
      %s234 = smul.addr %s233, 4
      %s235 = scalar_lea.vmem %s3, %s234
      %s236 = sld [smem:[#allocation5 + %s32]]
      %s237 = smul.u32 16, %s236
      %s238 = sld [smem:[#allocation5 + %s32]]
      %p239 = scmp.lt.s32.totalorder %s238, 1
      %s240 = scalar_select %p239, %s238, 1
      %s241 = scalar_lea.vmem %s6, %s240
      %s242 = sld [smem:[#allocation5 + %s32]]
      %s243 = sld [smem:[#allocation4 + %s32]]
      %s244 = smul.u32 4, %s243
      %p245 = scmp.lt.s32.totalorder %s244, 7
      %s246 = scalar_select %p245, %s244, 7
      %s247 = smul.addr %s246, 8
      %s248 = scalar_lea.vmem %s7, %s247
      %s249 = sld [smem:[#allocation4 + %s32]]
      %s250 = smul.u32 4, %s249
      %s252 = sld [smem:[#allocation6 + %s32]]
      %s253 = sand.u32 %s252, 1
      %p254 = scmp.ne.s32.totalorder %s253, 0
      %s255 = sand.u32 %s252, 2
      %p256 = scmp.ne.s32.totalorder %s255, 0
      %s257 = sand.u32 %s252, 4
      %p258 = scmp.ne.s32.totalorder %s257, 0
      // Predicated region
      $region37: #{graph_attention_forward.1} parent=35 // pred_check
        %p259 = pneg %p254
      $region38: #{graph_attention_forward.1} parent=35 // pred_check_branch
        %261 = sbr.rel (%p259) target = $region40
      $region39: #{graph_attention_forward.1} parent=35 // pred_region
        %262 = vst [vmem:[#allocation2] sm:$0xff] 0.0
        %263 = vst [vmem:[#allocation2 + $0x8] sm:$0xff] 0.0
        %264 = vst [vmem:[#allocation2 + $0x10] sm:$0xff] 0.0
        %265 = vst [vmem:[#allocation2 + $0x18] sm:$0xff] 0.0
      $region40: #{graph_attention_forward.1} parent=35 // pred_fallthru
        _
      // Predicated region
      $region41: #{graph_attention_forward.1} parent=35 // pred_check
        %p266 = pneg %p258
      $region42: #{graph_attention_forward.1} parent=35 // pred_check_branch
        %268 = sbr.rel (%p266) target = $region44
      $region43: #{graph_attention_forward.1} parent=35 // pred_region
        %v269 = vld [vmem:[%s235] sm:$0xf]
        %v270 = vld [vmem:[%s235 + $0x4] sm:$0xf]
        %v271 = vld [vmem:[%s235 + $0x8] sm:$0xf]
        %v272 = vld [vmem:[%s235 + $0xc] sm:$0xf]
        %v273 = vld [vmem:[%s235 + $0x10] sm:$0xf]
        %v274 = vld [vmem:[%s235 + $0x14] sm:$0xf]
        %v275 = vld [vmem:[%s235 + $0x18] sm:$0xf]
        %v276 = vld [vmem:[%s235 + $0x1c] sm:$0xf]
        %v277 = vld [vmem:[%s235 + $0x20] sm:$0xf]
        %v278 = vld [vmem:[%s235 + $0x24] sm:$0xf]
        %v279 = vld [vmem:[%s235 + $0x28] sm:$0xf]
        %v280 = vld [vmem:[%s235 + $0x2c] sm:$0xf]
        %v281 = vld [vmem:[%s235 + $0x30] sm:$0xf]
        %v282 = vld [vmem:[%s235 + $0x34] sm:$0xf]
        %v283 = vld [vmem:[%s235 + $0x38] sm:$0xf]
        %v284 = vld [vmem:[%s235 + $0x3c] sm:$0xf]
        %v285 = vld [vmem:[%s4] sm:$0xf]
        %v286 = vld [vmem:[%s4 + $0x4] sm:$0xf]
        %v287 = vld [vmem:[%s4 + $0x8] sm:$0xf]
        %v288 = vld [vmem:[%s4 + $0xc] sm:$0xf]
        %v289 = vld [vmem:[%s4 + $0x10] sm:$0xf]
        %v290 = vld [vmem:[%s4 + $0x14] sm:$0xf]
        %v291 = vld [vmem:[%s4 + $0x18] sm:$0xf]
        %v292 = vld [vmem:[%s4 + $0x1c] sm:$0xf]
        %v293 = vld [vmem:[%s4 + $0x20] sm:$0xf]
        %v294 = vld [vmem:[%s4 + $0x24] sm:$0xf]
        %v295 = vld [vmem:[%s4 + $0x28] sm:$0xf]
        %v296 = vld [vmem:[%s4 + $0x2c] sm:$0xf]
        %v297 = vld [vmem:[%s4 + $0x30] sm:$0xf]
        %v298 = vld [vmem:[%s4 + $0x34] sm:$0xf]
        %v299 = vld [vmem:[%s4 + $0x38] sm:$0xf]
        %v300 = vld [vmem:[%s4 + $0x3c] sm:$0xf]
        %v317 = vunpack.c.l.b16 %v269
        %v318 = vunpack.c.l.b16 %v270
        %v319 = vunpack.c.l.b16 %v271
        %v320 = vunpack.c.l.b16 %v272
        %v321 = vunpack.c.l.b16 %v273
        %v322 = vunpack.c.l.b16 %v274
        %v323 = vunpack.c.l.b16 %v275
        %v324 = vunpack.c.l.b16 %v276
        %v325 = vunpack.c.l.b16 %v277
        %v326 = vunpack.c.l.b16 %v278
        %v327 = vunpack.c.l.b16 %v279
        %v328 = vunpack.c.l.b16 %v280
        %v329 = vunpack.c.l.b16 %v281
        %v330 = vunpack.c.l.b16 %v282
        %v331 = vunpack.c.l.b16 %v283
        %v332 = vunpack.c.l.b16 %v284
        %v333 = vpack.c.b16 %v318, %v317
        %v334 = vpack.c.b16 %v320, %v319
        %v335 = vpack.c.b16 %v322, %v321
        %v336 = vpack.c.b16 %v324, %v323
        %v337 = vpack.c.b16 %v326, %v325
        %v338 = vpack.c.b16 %v328, %v327
        %v339 = vpack.c.b16 %v330, %v329
        %v340 = vpack.c.b16 %v332, %v331
        %v365 = vunpack.c.l.b16 %v285
        %v366 = vunpack.c.l.b16 %v286
        %v367 = vunpack.c.l.b16 %v287
        %v368 = vunpack.c.l.b16 %v288
        %v369 = vunpack.c.l.b16 %v289
        %v370 = vunpack.c.l.b16 %v290
        %v371 = vunpack.c.l.b16 %v291
        %v372 = vunpack.c.l.b16 %v292
        %v373 = vunpack.c.l.b16 %v293
        %v374 = vunpack.c.l.b16 %v294
        %v375 = vunpack.c.l.b16 %v295
        %v376 = vunpack.c.l.b16 %v296
        %v377 = vunpack.c.l.b16 %v297
        %v378 = vunpack.c.l.b16 %v298
        %v379 = vunpack.c.l.b16 %v299
        %v380 = vunpack.c.l.b16 %v300
        %v381 = vpack.c.b16 %v366, %v365
        %v382 = vpack.c.b16 %v368, %v367
        %v383 = vpack.c.b16 %v370, %v369
        %v384 = vpack.c.b16 %v372, %v371
        %v385 = vpack.c.b16 %v374, %v373
        %v386 = vpack.c.b16 %v376, %v375
        %v387 = vpack.c.b16 %v378, %v377
        %v388 = vpack.c.b16 %v380, %v379
        %397 = vmatprep.subr.bf16.mxu0 0
        %398 = vmatpush1.bf16.msra.mxu0 %v381
        %399 = vmatprep.subr.bf16.mxu0 0
        %400 = vmatpush1.bf16.msra.mxu0 %v382
        %401 = vmatprep.subr.bf16.mxu0 0
        %402 = vmatpush1.bf16.msra.mxu0 %v383
        %403 = vmatprep.subr.bf16.mxu0 0
        %404 = vmatpush1.bf16.msra.mxu0 %v384
        %405 = vmatprep.subr.bf16.mxu0 0
        %406 = vmatpush1.bf16.msra.mxu0 %v385
        %407 = vmatprep.subr.bf16.mxu0 0
        %408 = vmatpush1.bf16.msra.mxu0 %v386
        %409 = vmatprep.subr.bf16.mxu0 0
        %410 = vmatpush1.bf16.msra.mxu0 %v387
        %411 = vmatprep.subr.bf16.mxu0 0
        %412 = vmatpush1.bf16.msra.mxu0 %v388
        %413 = vmatprep.subr.bf16.mxu0 0
        %414 = vmatpush1.bf16.msra.mxu0 0
        %415 = vmatprep.subr.bf16.mxu0 0
        %416 = vmatpush1.bf16.msra.mxu0 0
        %417 = vmatprep.subr.bf16.mxu0 0
        %418 = vmatpush1.bf16.msra.mxu0 0
        %419 = vmatprep.subr.bf16.mxu0 0
        %420 = vmatpush1.bf16.msra.mxu0 0
        %421 = vmatprep.subr.bf16.mxu0 0
        %422 = vmatpush1.bf16.msra.mxu0 0
        %423 = vmatprep.subr.bf16.mxu0 0
        %424 = vmatpush1.bf16.msra.mxu0 0
        %425 = vmatprep.subr.bf16.mxu0 0
        %426 = vmatpush1.bf16.msra.mxu0 0
        %427 = vmatprep.subr.bf16.mxu0 0
        %428 = vmatpush1.bf16.msra.mxu0 0
        %429 = vmatprep.mubr.bf16.mxu0 0
        %430 = vmatmul.mubr.bf16.gmra.mrb[0].mxu0 %v333
        %v431 = vpop.f32.mrb[0].mxu0
        %v432 = vadd.f32 0.0, %v431
        %v433 = vpop.f32.mrb[0].mxu0
        %v434 = vpop.f32.mrb[0].mxu0
        %v435 = vadd.f32 0.0, %v434
        %v436 = vpop.f32.mrb[0].mxu0
        %437 = vmatprep.mubr.bf16.mxu0 0
        %438 = vmatmul.mubr.bf16.gmra.mrb[0].mxu0 %v334
        %v439 = vpop.f32.mrb[0].mxu0
        %v440 = vadd.f32 0.0, %v439
        %v441 = vpop.f32.mrb[0].mxu0
        %v442 = vpop.f32.mrb[0].mxu0
        %v443 = vadd.f32 0.0, %v442
        %v444 = vpop.f32.mrb[0].mxu0
        %445 = vmatprep.mubr.bf16.mxu0 0
        %446 = vmatmul.mubr.bf16.gmra.mrb[0].mxu0 %v335
        %v447 = vpop.f32.mrb[0].mxu0
        %v448 = vadd.f32 0.0, %v447
        %v449 = vpop.f32.mrb[0].mxu0
        %v450 = vpop.f32.mrb[0].mxu0
        %v451 = vadd.f32 0.0, %v450
        %v452 = vpop.f32.mrb[0].mxu0
        %453 = vmatprep.mubr.bf16.mxu0 0
        %454 = vmatmul.mubr.bf16.gmra.mrb[0].mxu0 %v336
        %v455 = vpop.f32.mrb[0].mxu0
        %v456 = vadd.f32 0.0, %v455
        %v457 = vpop.f32.mrb[0].mxu0
        %v458 = vpop.f32.mrb[0].mxu0
        %v459 = vadd.f32 0.0, %v458
        %v460 = vpop.f32.mrb[0].mxu0
        %461 = vmatprep.mubr.bf16.mxu0 0
        %462 = vmatmul.mubr.bf16.gmra.mrb[0].mxu0 %v337
        %v463 = vpop.f32.mrb[0].mxu0
        %v464 = vadd.f32 0.0, %v463
        %v465 = vpop.f32.mrb[0].mxu0
        %v466 = vpop.f32.mrb[0].mxu0
        %v467 = vadd.f32 0.0, %v466
        %v468 = vpop.f32.mrb[0].mxu0
        %469 = vmatprep.mubr.bf16.mxu0 0
        %470 = vmatmul.mubr.bf16.gmra.mrb[0].mxu0 %v338
        %v471 = vpop.f32.mrb[0].mxu0
        %v472 = vadd.f32 0.0, %v471
        %v473 = vpop.f32.mrb[0].mxu0
        %v474 = vpop.f32.mrb[0].mxu0
        %v475 = vadd.f32 0.0, %v474
        %v476 = vpop.f32.mrb[0].mxu0
        %477 = vmatprep.mubr.bf16.mxu0 0
        %478 = vmatmul.mubr.bf16.gmra.mrb[0].mxu0 %v339
        %v479 = vpop.f32.mrb[0].mxu0
        %v480 = vadd.f32 0.0, %v479
        %v481 = vpop.f32.mrb[0].mxu0
        %v482 = vpop.f32.mrb[0].mxu0
        %v483 = vadd.f32 0.0, %v482
        %v484 = vpop.f32.mrb[0].mxu0
        %485 = vmatprep.mubr.bf16.mxu0 0
        %486 = vmatmul.mubr.bf16.gmra.mrb[0].mxu0 %v340
        %v487 = vpop.f32.mrb[0].mxu0
        %v488 = vadd.f32 0.0, %v487
        %v489 = vpop.f32.mrb[0].mxu0
        %v490 = vpop.f32.mrb[0].mxu0
        %v491 = vadd.f32 0.0, %v490
        %v492 = vpop.f32.mrb[0].mxu0
        %493 = vdwg.mxu0
        %v494 = vld [vmem:[%s5] sm:$0x1]
        %v496 = vlaneseq
        %v497 = vshrl.u32 %v496, 7
        %v498 = vsub.s32 0, %v497
        %v499 = vrot.slane %v494, %v498
        %v501 = vmul.f32 %v432, %v499
        %v502 = vmul.f32 %v435, %v499
        %v503 = vmul.f32 %v440, %v499
        %v504 = vmul.f32 %v443, %v499
        %v505 = vmul.f32 %v448, %v499
        %v506 = vmul.f32 %v451, %v499
        %v507 = vmul.f32 %v456, %v499
        %v508 = vmul.f32 %v459, %v499
        %v509 = vmul.f32 %v464, %v499
        %v510 = vmul.f32 %v467, %v499
        %v511 = vmul.f32 %v472, %v499
        %v512 = vmul.f32 %v475, %v499
        %v513 = vmul.f32 %v480, %v499
        %v514 = vmul.f32 %v483, %v499
        %v515 = vmul.f32 %v488, %v499
        %v516 = vmul.f32 %v491, %v499
        %517 = vadd.xlane.f32.xlu0 %v501
        %v518 = vpop.xlane.xlu0 %517
        %519 = vadd.xlane.f32.xlu0 %v502
        %v520 = vpop.xlane.xlu0 %519
        %521 = vadd.xlane.f32.xlu0 %v503
        %v522 = vpop.xlane.xlu0 %521
        %523 = vadd.xlane.f32.xlu0 %v504
        %v524 = vpop.xlane.xlu0 %523
        %525 = vadd.xlane.f32.xlu0 %v505
        %v526 = vpop.xlane.xlu0 %525
        %527 = vadd.xlane.f32.xlu0 %v506
        %v528 = vpop.xlane.xlu0 %527
        %529 = vadd.xlane.f32.xlu0 %v507
        %v530 = vpop.xlane.xlu0 %529
        %531 = vadd.xlane.f32.xlu0 %v508
        %v532 = vpop.xlane.xlu0 %531
        %533 = vadd.xlane.f32.xlu0 %v509
        %v534 = vpop.xlane.xlu0 %533
        %535 = vadd.xlane.f32.xlu0 %v510
        %v536 = vpop.xlane.xlu0 %535
        %537 = vadd.xlane.f32.xlu0 %v511
        %v538 = vpop.xlane.xlu0 %537
        %539 = vadd.xlane.f32.xlu0 %v512
        %v540 = vpop.xlane.xlu0 %539
        %541 = vadd.xlane.f32.xlu0 %v513
        %v542 = vpop.xlane.xlu0 %541
        %543 = vadd.xlane.f32.xlu0 %v514
        %v544 = vpop.xlane.xlu0 %543
        %545 = vadd.xlane.f32.xlu0 %v515
        %v546 = vpop.xlane.xlu0 %545
        %547 = vadd.xlane.f32.xlu0 %v516
        %v548 = vpop.xlane.xlu0 %547
        %vm549 = vcmp.gt.f32.partialorder %v518, 0.0
        %vm550 = vcmp.gt.f32.partialorder %v520, 0.0
        %vm551 = vcmp.gt.f32.partialorder %v522, 0.0
        %vm552 = vcmp.gt.f32.partialorder %v524, 0.0
        %vm553 = vcmp.gt.f32.partialorder %v526, 0.0
        %vm554 = vcmp.gt.f32.partialorder %v528, 0.0
        %vm555 = vcmp.gt.f32.partialorder %v530, 0.0
        %vm556 = vcmp.gt.f32.partialorder %v532, 0.0
        %vm557 = vcmp.gt.f32.partialorder %v534, 0.0
        %vm558 = vcmp.gt.f32.partialorder %v536, 0.0
        %vm559 = vcmp.gt.f32.partialorder %v538, 0.0
        %vm560 = vcmp.gt.f32.partialorder %v540, 0.0
        %vm561 = vcmp.gt.f32.partialorder %v542, 0.0
        %vm562 = vcmp.gt.f32.partialorder %v544, 0.0
        %vm563 = vcmp.gt.f32.partialorder %v546, 0.0
        %vm564 = vcmp.gt.f32.partialorder %v548, 0.0
        %v565 = vmul.f32 %v518, 0.2
        %v566 = vmul.f32 %v520, 0.2
        %v567 = vmul.f32 %v522, 0.2
        %v568 = vmul.f32 %v524, 0.2
        %v569 = vmul.f32 %v526, 0.2
        %v570 = vmul.f32 %v528, 0.2
        %v571 = vmul.f32 %v530, 0.2
        %v572 = vmul.f32 %v532, 0.2
        %v573 = vmul.f32 %v534, 0.2
        %v574 = vmul.f32 %v536, 0.2
        %v575 = vmul.f32 %v538, 0.2
        %v576 = vmul.f32 %v540, 0.2
        %v577 = vmul.f32 %v542, 0.2
        %v578 = vmul.f32 %v544, 0.2
        %v579 = vmul.f32 %v546, 0.2
        %v580 = vmul.f32 %v548, 0.2
        %v581 = vsel %vm549, %v518, %v565
        %v582 = vsel %vm550, %v520, %v566
        %v583 = vsel %vm551, %v522, %v567
        %v584 = vsel %vm552, %v524, %v568
        %v585 = vsel %vm553, %v526, %v569
        %v586 = vsel %vm554, %v528, %v570
        %v587 = vsel %vm555, %v530, %v571
        %v588 = vsel %vm556, %v532, %v572
        %v589 = vsel %vm557, %v534, %v573
        %v590 = vsel %vm558, %v536, %v574
        %v591 = vsel %vm559, %v538, %v575
        %v592 = vsel %vm560, %v540, %v576
        %v593 = vsel %vm561, %v542, %v577
        %v594 = vsel %vm562, %v544, %v578
        %v595 = vsel %vm563, %v546, %v579
        %v596 = vsel %vm564, %v548, %v580
        %v597 = vsub.f32 0.0, %v581
        %v598 = vsub.f32 0.0, %v582
        %v599 = vsub.f32 0.0, %v583
        %v600 = vsub.f32 0.0, %v584
        %v601 = vsub.f32 0.0, %v585
        %v602 = vsub.f32 0.0, %v586
        %v603 = vsub.f32 0.0, %v587
        %v604 = vsub.f32 0.0, %v588
        %v605 = vsub.f32 0.0, %v589
        %v606 = vsub.f32 0.0, %v590
        %v607 = vsub.f32 0.0, %v591
        %v608 = vsub.f32 0.0, %v592
        %v609 = vsub.f32 0.0, %v593
        %v610 = vsub.f32 0.0, %v594
        %v611 = vsub.f32 0.0, %v595
        %v612 = vsub.f32 0.0, %v596
        %v613 = vmul.f32 %v597, 1.442695
        %v614 = vpow.pop %v613
        %v615 = vmul.f32 %v598, 1.442695
        %v616 = vpow.pop %v615
        %v617 = vmul.f32 %v599, 1.442695
        %v618 = vpow.pop %v617
        %v619 = vmul.f32 %v600, 1.442695
        %v620 = vpow.pop %v619
        %v621 = vmul.f32 %v601, 1.442695
        %v622 = vpow.pop %v621
        %v623 = vmul.f32 %v602, 1.442695
        %v624 = vpow.pop %v623
        %v625 = vmul.f32 %v603, 1.442695
        %v626 = vpow.pop %v625
        %v627 = vmul.f32 %v604, 1.442695
        %v628 = vpow.pop %v627
        %v629 = vmul.f32 %v605, 1.442695
        %v630 = vpow.pop %v629
        %v631 = vmul.f32 %v606, 1.442695
        %v632 = vpow.pop %v631
        %v633 = vmul.f32 %v607, 1.442695
        %v634 = vpow.pop %v633
        %v635 = vmul.f32 %v608, 1.442695
        %v636 = vpow.pop %v635
        %v637 = vmul.f32 %v609, 1.442695
        %v638 = vpow.pop %v637
        %v639 = vmul.f32 %v610, 1.442695
        %v640 = vpow.pop %v639
        %v641 = vmul.f32 %v611, 1.442695
        %v642 = vpow.pop %v641
        %v643 = vmul.f32 %v612, 1.442695
        %v644 = vpow.pop %v643
        %v645 = vlaneseq
        %v646 = vand.u32 %v645, 127
        %vm647 = vcmp.eq.s32.totalorder %v646, 32
        %v648 = vsel %vm647, 1, 0
        %v649 = vcvt.s32.f32 %v648
        %v650 = vadd.f32 %v432, %v649
        %v651 = vadd.f32 %v435, %v649
        %v652 = vadd.f32 %v440, %v649
        %v653 = vadd.f32 %v443, %v649
        %v654 = vadd.f32 %v448, %v649
        %v655 = vadd.f32 %v451, %v649
        %v656 = vadd.f32 %v456, %v649
        %v657 = vadd.f32 %v459, %v649
        %v658 = vadd.f32 %v464, %v649
        %v659 = vadd.f32 %v467, %v649
        %v660 = vadd.f32 %v472, %v649
        %v661 = vadd.f32 %v475, %v649
        %v662 = vadd.f32 %v480, %v649
        %v663 = vadd.f32 %v483, %v649
        %v664 = vadd.f32 %v488, %v649
        %v665 = vadd.f32 %v491, %v649
        %v666 = vmul.f32 %v614, %v650
        %v667 = vmul.f32 %v616, %v651
        %v668 = vmul.f32 %v618, %v652
        %v669 = vmul.f32 %v620, %v653
        %v670 = vmul.f32 %v622, %v654
        %v671 = vmul.f32 %v624, %v655
        %v672 = vmul.f32 %v626, %v656
        %v673 = vmul.f32 %v628, %v657
        %v674 = vmul.f32 %v630, %v658
        %v675 = vmul.f32 %v632, %v659
        %v676 = vmul.f32 %v634, %v660
        %v677 = vmul.f32 %v636, %v661
        %v678 = vmul.f32 %v638, %v662
        %v679 = vmul.f32 %v640, %v663
        %v680 = vmul.f32 %v642, %v664
        %v681 = vmul.f32 %v644, %v665
        %v682 = vpack.c.bf16 %v667, %v666
        %v683 = vpack.c.bf16 %v669, %v668
        %v684 = vpack.c.bf16 %v671, %v670
        %v685 = vpack.c.bf16 %v673, %v672
        %v686 = vpack.c.bf16 %v675, %v674
        %v687 = vpack.c.bf16 %v677, %v676
        %v688 = vpack.c.bf16 %v679, %v678
        %v689 = vpack.c.bf16 %v681, %v680
        %v690 = vld [vmem:[%s241] sm:$0x1]
        %s691 = sld [smem:[#allocation4 + %s32]]
        %s692 = smul.u32 %s691, 32
        %v693 = vlaneseq
        %v694 = vshrl.u32 %v693, 7
        %v695 = vadd.s32 %v694, 8
        %v696 = vadd.s32 %v694, 16
        %v697 = vadd.s32 %v694, 24
        %v698 = vstv %s692
        %v699 = vadd.s32 %v698, %v694
        %v700 = vadd.s32 %v698, %v695
        %v701 = vadd.s32 %v698, %v696
        %v702 = vadd.s32 %v698, %v697
        %v703 = vlaneseq
        %v704 = vshrl.u32 %v703, 7
        %v705 = vsub.s32 0, %v704
        %v706 = vrot.slane %v690, %v705
        %vm707 = vcmp.eq.s32.totalorder %v699, %v706
        %vm708 = vcmp.eq.s32.totalorder %v700, %v706
        %vm709 = vcmp.eq.s32.totalorder %v701, %v706
        %vm710 = vcmp.eq.s32.totalorder %v702, %v706
        %v711 = vsel %vm707, 1, 0
        %v712 = vsel %vm708, 1, 0
        %v713 = vsel %vm709, 1, 0
        %v714 = vsel %vm710, 1, 0
        %v715 = vcvt.s32.f32 %v711
        %v716 = vcvt.s32.f32 %v712
        %v717 = vcvt.s32.f32 %v713
        %v718 = vcvt.s32.f32 %v714
        %v719 = vpack.c.bf16 %v716, %v715
        %v720 = vpack.c.bf16 %v718, %v717
        %v721 = vld [vmem:[#allocation2] sm:$0xff]
        %v722 = vld [vmem:[#allocation2 + $0x8] sm:$0xff]
        %v723 = vld [vmem:[#allocation2 + $0x10] sm:$0xff]
        %v724 = vld [vmem:[#allocation2 + $0x18] sm:$0xff]
        %725 = vmatprep.subr.bf16.mxu0 0
        %726 = vmatpush1.bf16.msra.mxu0 %v682
        %727 = vmatprep.subr.bf16.mxu0 0
        %728 = vmatpush1.bf16.msra.mxu0 %v683
        %729 = vmatprep.subr.bf16.mxu0 0
        %730 = vmatpush1.bf16.msra.mxu0 %v684
        %731 = vmatprep.subr.bf16.mxu0 0
        %732 = vmatpush1.bf16.msra.mxu0 %v685
        %733 = vmatprep.subr.bf16.mxu0 0
        %734 = vmatpush1.bf16.msra.mxu0 %v686
        %735 = vmatprep.subr.bf16.mxu0 0
        %736 = vmatpush1.bf16.msra.mxu0 %v687
        %737 = vmatprep.subr.bf16.mxu0 0
        %738 = vmatpush1.bf16.msra.mxu0 %v688
        %739 = vmatprep.subr.bf16.mxu0 0
        %740 = vmatpush1.bf16.msra.mxu0 %v689
        %741 = vmatprep.subr.bf16.mxu0 0
        %742 = vmatpush1.bf16.msra.mxu0 0
        %743 = vmatprep.subr.bf16.mxu0 0
        %744 = vmatpush1.bf16.msra.mxu0 0
        %745 = vmatprep.subr.bf16.mxu0 0
        %746 = vmatpush1.bf16.msra.mxu0 0
        %747 = vmatprep.subr.bf16.mxu0 0
        %748 = vmatpush1.bf16.msra.mxu0 0
        %749 = vmatprep.subr.bf16.mxu0 0
        %750 = vmatpush1.bf16.msra.mxu0 0
        %751 = vmatprep.subr.bf16.mxu0 0
        %752 = vmatpush1.bf16.msra.mxu0 0
        %753 = vmatprep.subr.bf16.mxu0 0
        %754 = vmatpush1.bf16.msra.mxu0 0
        %755 = vmatprep.subr.bf16.mxu0 0
        %756 = vmatpush1.bf16.msra.mxu0 0
        %757 = vmatprep.mubr.bf16.mxu0 0
        %758 = vmatmul.mubr.bf16.gmra.mrb[0].mxu0 %v719
        %v759 = vpop.f32.mrb[0].mxu0
        %v760 = vadd.f32 0.0, %v759
        %v761 = vpop.f32.mrb[0].mxu0
        %v762 = vpop.f32.mrb[0].mxu0
        %v763 = vadd.f32 0.0, %v762
        %v764 = vpop.f32.mrb[0].mxu0
        %765 = vmatprep.mubr.bf16.mxu0 0
        %766 = vmatmul.mubr.bf16.gmra.mrb[0].mxu0 %v720
        %v767 = vpop.f32.mrb[0].mxu0
        %v768 = vadd.f32 0.0, %v767
        %v769 = vpop.f32.mrb[0].mxu0
        %v770 = vpop.f32.mrb[0].mxu0
        %v771 = vadd.f32 0.0, %v770
        %v772 = vpop.f32.mrb[0].mxu0
        %773 = vdwg.mxu0
        %v774 = vadd.f32 %v721, %v760
        %v775 = vadd.f32 %v722, %v763
        %v776 = vadd.f32 %v723, %v768
        %v777 = vadd.f32 %v724, %v771
        %778 = vst [vmem:[#allocation2] sm:$0xff] %v774
        %779 = vst [vmem:[#allocation2 + $0x8] sm:$0xff] %v775
        %780 = vst [vmem:[#allocation2 + $0x10] sm:$0xff] %v776
        %781 = vst [vmem:[#allocation2 + $0x18] sm:$0xff] %v777
      $region44: #{graph_attention_forward.1} parent=35 // pred_fallthru
        _
      // Predicated region
      $region45: #{graph_attention_forward.1} parent=35 // pred_check
        %p782 = pneg %p256
      $region46: #{graph_attention_forward.1} parent=35 // pred_check_branch
        %784 = sbr.rel (%p782) target = $region48
      $region47: #{graph_attention_forward.1} parent=35 // pred_region
        %v785 = vld [vmem:[#allocation2] sm:$0xff]
        %v786 = vld [vmem:[#allocation2 + $0x8] sm:$0xff]
        %v787 = vld [vmem:[#allocation2 + $0x10] sm:$0xff]
        %v788 = vld [vmem:[#allocation2 + $0x18] sm:$0xff]
        %v789 = vlaneseq
        %v790 = vand.u32 %v789, 127
        %vm791 = vcmp.eq.s32.totalorder %v790, 32
        %v792 = vsel %vm791, 1, 0
        %vm793 = vcmp.eq.s32.totalorder %v792, 1
        %v794 = vsel %vm793, %v785, 0.0
        %v795 = vsel %vm793, %v786, 0.0
        %v796 = vsel %vm793, %v787, 0.0
        %v797 = vsel %vm793, %v788, 0.0
        %798 = vadd.xlane.f32.xlu0 %v794
        %v799 = vpop.xlane.xlu0 %798
        %800 = vadd.xlane.f32.xlu0 %v795
        %v801 = vpop.xlane.xlu0 %800
        %802 = vadd.xlane.f32.xlu0 %v796
        %v803 = vpop.xlane.xlu0 %802
        %804 = vadd.xlane.f32.xlu0 %v797
        %v805 = vpop.xlane.xlu0 %804
        %vm806 = vcmp.eq.f32.partialorder %v799, 0.0
        %vm807 = vcmp.eq.f32.partialorder %v801, 0.0
        %vm808 = vcmp.eq.f32.partialorder %v803, 0.0
        %vm809 = vcmp.eq.f32.partialorder %v805, 0.0
        %v810 = vsel %vm806, 1e-12, %v799
        %v811 = vsel %vm807, 1e-12, %v801
        %v812 = vsel %vm808, 1e-12, %v803
        %v813 = vsel %vm809, 1e-12, %v805
        %v814 = vrcp.pop %v810
        %v815 = vrcp.pop %v811
        %v816 = vrcp.pop %v812
        %v817 = vrcp.pop %v813
        %v818 = vmul.f32 %v785, %v814
        %v819 = vmul.f32 %v786, %v815
        %v820 = vmul.f32 %v787, %v816
        %v821 = vmul.f32 %v788, %v817
        %vm822 = vcmp.gt.f32.partialorder %v818, 0.0
        %vm823 = vcmp.gt.f32.partialorder %v819, 0.0
        %vm824 = vcmp.gt.f32.partialorder %v820, 0.0
        %vm825 = vcmp.gt.f32.partialorder %v821, 0.0
        %v826 = vmin.f32 %v818, 0.0
        %v827 = vmin.f32 %v819, 0.0
        %v828 = vmin.f32 %v820, 0.0
        %v829 = vmin.f32 %v821, 0.0
        %v830 = vmul.f32 %v826, 1.442695
        %v831 = vpow.pop %v830
        %v832 = vmul.f32 %v827, 1.442695
        %v833 = vpow.pop %v832
        %v834 = vmul.f32 %v828, 1.442695
        %v835 = vpow.pop %v834
        %v836 = vmul.f32 %v829, 1.442695
        %v837 = vpow.pop %v836
        %v838 = vsub.f32 %v831, 1.0
        %v839 = vsub.f32 %v833, 1.0
        %v840 = vsub.f32 %v835, 1.0
        %v841 = vsub.f32 %v837, 1.0
        %v842 = vsel %vm822, %v818, %v838
        %v843 = vsel %vm823, %v819, %v839
        %v844 = vsel %vm824, %v820, %v840
        %v845 = vsel %vm825, %v821, %v841
        %846 = vst [vmem:[%s248] sm:$0xff] %v842
        %847 = vst [vmem:[%s248 + $0x8] sm:$0xff] %v843
        %848 = vst [vmem:[%s248 + $0x10] sm:$0xff] %v844
        %849 = vst [vmem:[%s248 + $0x18] sm:$0xff] %v845
      $region48: #{graph_attention_forward.1} parent=35 // pred_fallthru
        _
      %s850 = sld [smem:[#allocation4 + %s32]]
      %s851 = smul.u32 4, %s850
      %p852 = scmp.lt.s32.totalorder %s851, 7
      %s853 = scalar_select %p852, %s851, 7
      %s854 = smul.addr %s853, 8
      %s855 = scalar_lea.vmem %s7, %s854
      // Predicated region
      $region49: #{graph_attention_forward.1} parent=35 // pred_check
        %p856 = pneg %p150
      $region50: #{graph_attention_forward.1} parent=35 // pred_check_branch
        %858 = sbr.rel (%p856) target = $region52
      $region51: #{graph_attention_forward.1} parent=35 // pred_region
        %s859 = sld [smem:[#allocation4 + %s32]]
        %s860 = smul.u32 4, %s859
      $region52: #{graph_attention_forward.1} parent=35 // pred_fallthru
        _
    $region36: #{graph_attention_forward.1} parent=5 // pred_fallthru
      _
    %p861 = scmp.le.s32.totalorder 2, %s27
    // Predicated region
    $region53: #{graph_attention_forward.1} parent=5 // pred_check
      %p862 = pneg %p861
    $region54: #{graph_attention_forward.1} parent=5 // pred_check_branch
      %864 = sbr.rel (%p862) target = $region56
    $region55: #{graph_attention_forward.1} parent=5 // pred_region
      %s865 = ssub.s32 %s27, 2
      // Predicated region
      $region57: #{graph_attention_forward.1} parent=55 // pred_check
        %p866 = pneg %p156
      $region58: #{graph_attention_forward.1} parent=55 // pred_check_branch
        %868 = sbr.rel (%p866) target = $region60
      $region59: #{graph_attention_forward.1} parent=55 // pred_region
        %s869 = sld [smem:[#allocation4 + %s33]]
        %s870 = smul.u32 4, %s869
        %p871 = scmp.lt.s32.totalorder %s870, 7
        %s872 = scalar_select %p871, %s870, 7
        %s873 = smul.addr %s872, 8
        %s874 = scalar_lea.vmem %s7, %s873
      $region60: #{graph_attention_forward.1} parent=55 // pred_fallthru
        _
    $region56: #{graph_attention_forward.1} parent=5 // pred_fallthru
      _
  $region6: #{graph_attention_forward.1} parent=0 // loop_footer
    %s31 = sadd.s32 1, %s27
  $region7: #{graph_attention_forward.1} parent=0 // loop_footer_branch
    %26 = sbr.rel target = $region3
  $region8: #{graph_attention_forward.1} parent=0 // loop_exit
    _

</llo_original>
